<compile_context>
chip_gen: v5e
topology: v5e:2x2
jax: 0.10.0
libtpu: 0.0.40
codegen_flags: <defaults>
</compile_context>

<pallas_src>
import functools

import numpy as np
import jax
import jax.numpy as jnp
from jax.experimental import pallas as pl
from jax.experimental.pallas import tpu as pltpu


def _const_spec(shape, *, single_buffer=True):
    """BlockSpec for a grid-invariant operand (weights / biases / LN params).

    The index_map is constant, so no prefetch overlap is needed: request a
    single VMEM buffer (halves the weights' VMEM footprint vs the default
    double buffering).  Falls back to the default spec on older JAX.
    """
    index_map = lambda *_: (0,) * len(shape)
    if single_buffer:
        try:
            return pl.BlockSpec(shape, index_map, pipeline_mode=pl.Buffered(1))
        except Exception:  # pragma: no cover - JAX without pipeline_mode/Buffered
            pass
    return pl.BlockSpec(shape, index_map)


# --------------------------------------------------------------------------
# Kernel 1: LayerNorm + fused QKV projection, head-major output.
# --------------------------------------------------------------------------
def _qkv_prepass_kernel(x_ref, lnw_ref, lnb_ref, wqkv_ref, bqkv_ref,
                        q_ref, k_ref, v_ref,
                        *, n_heads, d_head, eps, mxu_dtype):
    x = x_ref[0]                                            # (tile, D) f32
    mu = jnp.mean(x, axis=-1, keepdims=True)
    xc = x - mu
    var = jnp.mean(xc * xc, axis=-1, keepdims=True)
    xn = xc * jax.lax.rsqrt(var + eps) * lnw_ref[...] + lnb_ref[...]

    # One full-width, lane-dense projection: (tile, D) @ (D, 3*H*dh).
    qkv = jnp.dot(xn.astype(mxu_dtype), wqkv_ref[...],
                  preferred_element_type=jnp.float32) + bqkv_ref[...]

    tr = x.shape[0]
    hd = n_heads * d_head

    def to_heads(m):                                        # (tile, H*dh) -> (H, tile, dh)
        return jnp.transpose(m.reshape(tr, n_heads, d_head), (1, 0, 2))

    q_ref[0] = to_heads(qkv[:, :hd]).astype(mxu_dtype)
    k_ref[0] = to_heads(qkv[:, hd:2 * hd]).astype(mxu_dtype)
    v_ref[0] = to_heads(qkv[:, 2 * hd:]).astype(mxu_dtype)


# --------------------------------------------------------------------------
# Kernel 2: flash attention over a triangular (scalar-prefetched) step table,
# output projection + residual add at the diagonal (= last) step of each
# query-tile group.
# --------------------------------------------------------------------------
def _flash_attn_kernel(qt_ref, kt_ref,                      # scalar-prefetch tables
                       x_ref, q_ref, k_ref, v_ref, wo_ref, bo_ref,
                       o_ref, m_scr, l_scr, acc_scr,
                       *, n_heads, d_head, tile, mxu_dtype, mask_value):
    t = pl.program_id(1)
    qi = qt_ref[t]
    ki = kt_ref[t]
    H, dh = n_heads, d_head

    # ---- first KV step of this query-tile group: reset online-softmax state.
    @pl.when(ki == 0)
    def _():
        m_scr[...] = jnp.full((H, tile, 1), -jnp.inf, jnp.float32)
        l_scr[...] = jnp.zeros((H, tile, 1), jnp.float32)
        acc_scr[...] = jnp.zeros((H, tile, dh), jnp.float32)

    v = v_ref[0]                                            # (H, tile, dh)
    # Every grid step contributes (triangular grid), so scores are always needed.
    s = jnp.einsum('hqd,hkd->hqk', q_ref[0], k_ref[0],
                   preferred_element_type=jnp.float32)      # (H, tile, tile) f32

    def online_update(scores):
        m_prev = m_scr[...]
        m_new = jnp.maximum(m_prev, jnp.max(scores, axis=-1, keepdims=True))
        # NOTE: finite mask fill (-1e5, matching PyTorch IGNORE) keeps
        # exp(m_prev - m_new) NaN-free; do not switch the fill to -inf.
        alpha = jnp.exp(m_prev - m_new)
        p = jnp.exp(scores - m_new)
        l_scr[...] = alpha * l_scr[...] + jnp.sum(p, axis=-1, keepdims=True)
        acc_scr[...] = alpha * acc_scr[...] + jnp.einsum(
            'hqk,hkd->hqd', p.astype(mxu_dtype), v,
            preferred_element_type=jnp.float32)
        m_scr[...] = m_new

    # ---- interior tiles (strictly below the diagonal): no mask work at all.
    @pl.when(ki < qi)
    def _():
        online_update(s)

    # ---- diagonal tile: apply causal mask, update, then finalize the group.
    @pl.when(ki == qi)
    def _():
        row = jax.lax.broadcasted_iota(jnp.int32, (tile, tile), 0)
        col = jax.lax.broadcasted_iota(jnp.int32, (tile, tile), 1)
        online_update(jnp.where((row >= col)[None], s, jnp.float32(mask_value)))

        z = acc_scr[...] * pl.reciprocal(l_scr[...], approx=True)   # (H,tile,dh) f32
        zc = jnp.transpose(z, (1, 0, 2)).reshape(tile, H * dh)      # (tile, H*dh)
        attn_out = jnp.dot(zc.astype(mxu_dtype), wo_ref[...],
                           preferred_element_type=jnp.float32)      # (tile, D)
        o_ref[0] = x_ref[0] + attn_out + bo_ref[...]


# --------------------------------------------------------------------------
# Wrapper
# --------------------------------------------------------------------------
def attn_only_block(x, params, *, n_heads, d_head, eps=1e-5,
                    use_attn_scale=True, tile=None,
                    mxu_dtype=jnp.bfloat16,
                    vmem_limit_bytes=64 * 1024 * 1024,
                    single_buffer_weights=True):
    """x: (B, S, D) f32.  params in native (PyTorch-module) shapes:
       W_Q/W_K/W_V: (H, dh, D)   W_O: (H, D, dh)
       b_Q/b_K/b_V: (H, dh)      b_O: (D,)   ln_w/ln_b: (D,).

    tile defaults to min(256, S): good for the 256-wide v6e/v7x MXU; pass
    tile=128 on v5e.  vmem_limit_bytes raises Mosaic's scoped-VMEM limit
    explicitly (re-derive for very large models on v7x's 64 MiB/TC VMEM)."""
    B, S, D = x.shape
    H, dh = n_heads, d_head
    hd = H * dh
    if tile is None:
        tile = min(256, S)
    assert S % tile == 0, "sequence length must be divisible by the tile size"
    assert tile % 8 == 0 or tile == S, "tile must be sublane-aligned"
    inv_scale = (1.0 / float(d_head) ** 0.5) if use_attn_scale else 1.0
    f32 = jnp.float32

    # --- one-time weight layout plumbing in XLA (outside the kernels) -------
    # (H, dh, D) -> (D, H*dh); attention scale folded into the Q projection.
    wq2 = jnp.transpose(params["W_Q"], (2, 0, 1)).reshape(D, hd) * inv_scale
    wk2 = jnp.transpose(params["W_K"], (2, 0, 1)).reshape(D, hd)
    wv2 = jnp.transpose(params["W_V"], (2, 0, 1)).reshape(D, hd)
    wqkv = jnp.concatenate([wq2, wk2, wv2], axis=1).astype(mxu_dtype)  # (D, 3*H*dh)
    bqkv = jnp.concatenate([params["b_Q"].reshape(hd) * inv_scale,
                            params["b_K"].reshape(hd),
                            params["b_V"].reshape(hd)]).reshape(1, 3 * hd).astype(f32)
    # (H, D, dh) -> (H*dh, D): one lane-dense output-projection matmul.
    wo2 = jnp.transpose(params["W_O"], (0, 2, 1)).reshape(hd, D).astype(mxu_dtype)
    bo = params["b_O"].reshape(1, D).astype(f32)
    lnw = params["ln_w"].reshape(1, D).astype(f32)
    lnb = params["ln_b"].reshape(1, D).astype(f32)

    # --- kernel 1: LN + fused QKV projection --------------------------------
    prepass = pl.pallas_call(
        functools.partial(_qkv_prepass_kernel, n_heads=H, d_head=dh,
                          eps=eps, mxu_dtype=mxu_dtype),
        out_shape=tuple(jax.ShapeDtypeStruct((B, H, S, dh), mxu_dtype)
                        for _ in range(3)),
        grid_spec=pltpu.PrefetchScalarGridSpec(
            num_scalar_prefetch=0,
            grid=(B, S // tile),
            in_specs=[
                pl.BlockSpec((1, tile, D), lambda b, i: (b, i, 0)),
                _const_spec((1, D), single_buffer=single_buffer_weights),
                _const_spec((1, D), single_buffer=single_buffer_weights),
                _const_spec((D, 3 * hd), single_buffer=single_buffer_weights),
                _const_spec((1, 3 * hd), single_buffer=single_buffer_weights),
            ],
            out_specs=tuple(
                pl.BlockSpec((1, H, tile, dh), lambda b, i: (b, 0, i, 0))
                for _ in range(3)),
        ),
        compiler_params=pltpu.CompilerParams(
            dimension_semantics=("parallel", "parallel"),
            vmem_limit_bytes=vmem_limit_bytes),
    )
    q_hm, k_hm, v_hm = prepass(x, lnw, lnb, wqkv, bqkv)

    # --- kernel 2: triangular-grid flash attention + out-proj + residual ----
    nq = S // tile
    # Visit only causally-contributing (q_tile, k_tile) pairs, grouped by
    # q_tile with k_tile ascending, so ki == qi is the last (and the only
    # masked) step of each group.  Note: the triangular packing trades the
    # qi-parallel axis for ~2x fewer steps; the batch axis stays "parallel"
    # for v7x 2-TensorCore sharding.
    qt_tbl = np.concatenate([np.full(i + 1, i, dtype=np.int32) for i in range(nq)])
    kt_tbl = np.concatenate([np.arange(i + 1, dtype=np.int32) for i in range(nq)])
    num_steps = int(qt_tbl.shape[0])

    flash = pl.pallas_call(
        functools.partial(_flash_attn_kernel, n_heads=H, d_head=dh, tile=tile,
                          mxu_dtype=mxu_dtype, mask_value=-100000.0),
        out_shape=jax.ShapeDtypeStruct((B, S, D), jnp.float32),
        grid_spec=pltpu.PrefetchScalarGridSpec(
            num_scalar_prefetch=2,
            grid=(B, num_steps),
            in_specs=[
                pl.BlockSpec((1, tile, D),
                             lambda b, t, qt, kt: (b, qt[t], 0)),       # residual x
                pl.BlockSpec((1, H, tile, dh),
                             lambda b, t, qt, kt: (b, 0, qt[t], 0)),    # Q
                pl.BlockSpec((1, H, tile, dh),
                             lambda b, t, qt, kt: (b, 0, kt[t], 0)),    # K
                pl.BlockSpec((1, H, tile, dh),
                             lambda b, t, qt, kt: (b, 0, kt[t], 0)),    # V
                _const_spec((hd, D), single_buffer=single_buffer_weights),  # W_O
                _const_spec((1, D), single_buffer=single_buffer_weights),   # b_O
            ],
            out_specs=pl.BlockSpec((1, tile, D),
                                   lambda b, t, qt, kt: (b, qt[t], 0)),
            scratch_shapes=[
                pltpu.VMEM((H, tile, 1), jnp.float32),    # running max
                pltpu.VMEM((H, tile, 1), jnp.float32),    # running denominator
                pltpu.VMEM((H, tile, dh), jnp.float32),   # running numerator
            ],
        ),
        compiler_params=pltpu.CompilerParams(
            dimension_semantics=("parallel", "arbitrary"),
            vmem_limit_bytes=vmem_limit_bytes),
    )
    return flash(jnp.asarray(qt_tbl), jnp.asarray(kt_tbl),
                 x, q_hm, k_hm, v_hm, wo2, bo)


# --------------------------------------------------------------------------
# Pure-JAX reference mirroring the PyTorch forward exactly.
# --------------------------------------------------------------------------
def _reference(x, params, *, n_heads, d_head, eps=1e-5, use_attn_scale=True):
    B, S, D = x.shape
    attn_scale = jnp.sqrt(jnp.float32(d_head)) if use_attn_scale else jnp.float32(1.0)

    xc = x - x.mean(-1, keepdims=True)
    scale = jnp.sqrt((xc ** 2).mean(-1, keepdims=True) + eps)
    xn = (xc / scale) * params["ln_w"] + params["ln_b"]

    q = jnp.einsum('ihm,bpm->bpih', params["W_Q"], xn) + params["b_Q"]
    k = jnp.einsum('ihm,bpm->bpih', params["W_K"], xn) + params["b_K"]
    v = jnp.einsum('ihm,bpm->bpih', params["W_V"], xn) + params["b_V"]
    scores = jnp.einsum('bpih,bqih->bipq', q, k) / attn_scale
    mask = jnp.tril(jnp.ones((S, S), bool))
    scores = jnp.where(mask, scores, jnp.float32(-100000.0))
    attn = jax.nn.softmax(scores, axis=-1)
    z = jnp.einsum('bpih,biqp->bqih', v, attn)
    out = jnp.einsum('idh,bqih->bqd', params["W_O"], z) + params["b_O"]
    return x + out


if __name__ == "__main__":
    B, S, D = 2, 8, 32
    n_heads, d_head = 4, 8

    key = jax.random.PRNGKey(0)
    ks = jax.random.split(key, 9)
    init = lambda k, shape: (0.02 * jax.random.normal(k, shape)).astype(jnp.float32)

    params = {
        "W_Q": init(ks[0], (n_heads, d_head, D)),
        "W_K": init(ks[1], (n_heads, d_head, D)),
        "W_V": init(ks[2], (n_heads, d_head, D)),
        "W_O": init(ks[3], (n_heads, D, d_head)),
        "b_Q": init(ks[4], (n_heads, d_head)),
        "b_K": init(ks[5], (n_heads, d_head)),
        "b_V": init(ks[6], (n_heads, d_head)),
        "b_O": init(ks[7], (D,)),
        "ln_w": jnp.ones((D,), jnp.float32),
        "ln_b": jnp.zeros((D,), jnp.float32),
    }
    x = jax.random.normal(ks[8], (B, S, D), jnp.float32)

    ref = _reference(x, params, n_heads=n_heads, d_head=d_head)

    # f32-on-MXU path: tight check against the reference.
    out_f32 = attn_only_block(x, params, n_heads=n_heads, d_head=d_head,
                              mxu_dtype=jnp.float32)
    out_f32 = jax.block_until_ready(out_f32)
    assert out_f32.shape == (B, S, D)
    assert jnp.allclose(out_f32, ref, atol=2e-3, rtol=2e-3)

    # bf16-on-MXU path (production config for v6e/v7x): looser tolerance.
    out_bf16 = attn_only_block(x, params, n_heads=n_heads, d_head=d_head,
                               mxu_dtype=jnp.bfloat16)
    out_bf16 = jax.block_until_ready(out_bf16)
    assert jnp.allclose(out_bf16, ref, atol=1e-2, rtol=1e-2)

    print("KERNEL_OK")
</pallas_src>

<mosaic_0001>
module attributes {stable_mosaic.version = 11 : i64} {
  func.func @_qkv_prepass_kernel(%arg0: i32, %arg1: i32, %arg2: memref<1x8x32xf32, #tpu.memory_space<vmem>>, %arg3: memref<1x32xf32, #tpu.memory_space<vmem>>, %arg4: memref<1x32xf32, #tpu.memory_space<vmem>>, %arg5: memref<32x96xf32, #tpu.memory_space<vmem>>, %arg6: memref<1x96xf32, #tpu.memory_space<vmem>>, %arg7: memref<1x4x8x8xf32, #tpu.memory_space<vmem>>, %arg8: memref<1x4x8x8xf32, #tpu.memory_space<vmem>>, %arg9: memref<1x4x8x8xf32, #tpu.memory_space<vmem>>) attributes {dimension_semantics = [#tpu.dimension_semantics<parallel>, #tpu.dimension_semantics<parallel>], iteration_bounds = array<i64: 2, 1>, scalar_prefetch = 0 : i64, scratch_operands = 0 : i64, tpu.core_type = #tpu.core_type<tc>, window_params = [{transform_indices = @transform_0, window_bounds = array<i64: 1, 8, 32>}, {pipeline_mode = #tpu.pipeline_mode<synchronous>, transform_indices = @transform_1, window_bounds = array<i64: 1, 32>}, {pipeline_mode = #tpu.pipeline_mode<synchronous>, transform_indices = @transform_2, window_bounds = array<i64: 1, 32>}, {pipeline_mode = #tpu.pipeline_mode<synchronous>, transform_indices = @transform_3, window_bounds = array<i64: 32, 96>}, {pipeline_mode = #tpu.pipeline_mode<synchronous>, transform_indices = @transform_4, window_bounds = array<i64: 1, 96>}, {transform_indices = @transform_5, window_bounds = array<i64: 1, 4, 8, 8>}, {transform_indices = @transform_6, window_bounds = array<i64: 1, 4, 8, 8>}, {transform_indices = @transform_7, window_bounds = array<i64: 1, 4, 8, 8>}]} {
    %c0 = arith.constant 0 : index
    %c0_0 = arith.constant 0 : index
    %c0_1 = arith.constant 0 : index
    %0 = vector.load %arg2[%c0, %c0_0, %c0_1] : memref<1x8x32xf32, #tpu.memory_space<vmem>>, vector<1x8x32xf32>
    %1 = vector.shape_cast %0 : vector<1x8x32xf32> to vector<8x32xf32>
    %cst = arith.constant dense<0.000000e+00> : vector<8xf32>
    %2 = vector.multi_reduction <add>, %1, %cst [1] : vector<8x32xf32> to vector<8xf32>
    %3 = vector.shape_cast %2 : vector<8xf32> to vector<8x1xf32>
    %cst_2 = arith.constant 3.200000e+01 : f32
    %4 = vector.broadcast %cst_2 : f32 to vector<8x1xf32>
    %5 = arith.divf %3, %4 : vector<8x1xf32>
    %6 = vector.broadcast %5 : vector<8x1xf32> to vector<8x32xf32>
    %7 = arith.subf %1, %6 : vector<8x32xf32>
    %8 = arith.mulf %7, %7 : vector<8x32xf32>
    %cst_3 = arith.constant dense<0.000000e+00> : vector<8xf32>
    %9 = vector.multi_reduction <add>, %8, %cst_3 [1] : vector<8x32xf32> to vector<8xf32>
    %10 = vector.shape_cast %9 : vector<8xf32> to vector<8x1xf32>
    %cst_4 = arith.constant 3.200000e+01 : f32
    %11 = vector.broadcast %cst_4 : f32 to vector<8x1xf32>
    %12 = arith.divf %10, %11 : vector<8x1xf32>
    %cst_5 = arith.constant 9.99999974E-6 : f32
    %13 = vector.broadcast %cst_5 : f32 to vector<8x1xf32>
    %14 = arith.addf %12, %13 : vector<8x1xf32>
    %15 = math.rsqrt %14 : vector<8x1xf32>
    %16 = vector.broadcast %15 : vector<8x1xf32> to vector<8x32xf32>
    %17 = arith.mulf %7, %16 : vector<8x32xf32>
    %c0_6 = arith.constant 0 : index
    %c0_7 = arith.constant 0 : index
    %18 = vector.load %arg3[%c0_6, %c0_7] : memref<1x32xf32, #tpu.memory_space<vmem>>, vector<1x32xf32>
    %19 = vector.broadcast %18 : vector<1x32xf32> to vector<8x32xf32>
    %20 = arith.mulf %17, %19 : vector<8x32xf32>
    %c0_8 = arith.constant 0 : index
    %c0_9 = arith.constant 0 : index
    %21 = vector.load %arg4[%c0_8, %c0_9] : memref<1x32xf32, #tpu.memory_space<vmem>>, vector<1x32xf32>
    %22 = vector.broadcast %21 : vector<1x32xf32> to vector<8x32xf32>
    %23 = arith.addf %20, %22 : vector<8x32xf32>
    %c0_10 = arith.constant 0 : index
    %c0_11 = arith.constant 0 : index
    %24 = vector.load %arg5[%c0_10, %c0_11] : memref<32x96xf32, #tpu.memory_space<vmem>>, vector<32x96xf32>
    %cst_12 = arith.constant dense<0.000000e+00> : vector<8x96xf32>
    %25 = tpu.matmul %23, %24, %cst_12 {dimension_numbers = #tpu.dot_dimension_numbers<[1], [0], [0], [1], [0, 0, 1, 1], [], []>} : vector<8x32xf32>, vector<32x96xf32>, vector<8x96xf32> -> vector<8x96xf32>
    %c0_13 = arith.constant 0 : index
    %c0_14 = arith.constant 0 : index
    %26 = vector.load %arg6[%c0_13, %c0_14] : memref<1x96xf32, #tpu.memory_space<vmem>>, vector<1x96xf32>
    %27 = vector.broadcast %26 : vector<1x96xf32> to vector<8x96xf32>
    %28 = arith.addf %25, %27 : vector<8x96xf32>
    %29 = vector.extract_strided_slice %28 {offsets = [0, 0], sizes = [8, 32], strides = [1, 1]} : vector<8x96xf32> to vector<8x32xf32>
    %30 = vector.shape_cast %29 : vector<8x32xf32> to vector<8x4x8xf32>
    %31 = tpu.transpose %30, [1, 0, 2] : vector<8x4x8xf32> -> vector<4x8x8xf32>
    %c0_15 = arith.constant 0 : index
    %c0_16 = arith.constant 0 : index
    %c0_17 = arith.constant 0 : index
    %c0_18 = arith.constant 0 : index
    %32 = vector.load %arg7[%c0_15, %c0_16, %c0_17, %c0_18] : memref<1x4x8x8xf32, #tpu.memory_space<vmem>>, vector<1x4x8x8xf32>
    %33 = vector.shape_cast %32 : vector<1x4x8x8xf32> to vector<4x8x8xf32>
    %34 = vector.shape_cast %31 : vector<4x8x8xf32> to vector<1x4x8x8xf32>
    tpu.vector_store %arg7[%c0_15, %c0_16, %c0_17, %c0_18], %34 {strides = array<i32>} : memref<1x4x8x8xf32, #tpu.memory_space<vmem>>, vector<1x4x8x8xf32>,
    %35 = vector.extract_strided_slice %28 {offsets = [0, 32], sizes = [8, 32], strides = [1, 1]} : vector<8x96xf32> to vector<8x32xf32>
    %36 = vector.shape_cast %35 : vector<8x32xf32> to vector<8x4x8xf32>
    %37 = tpu.transpose %36, [1, 0, 2] : vector<8x4x8xf32> -> vector<4x8x8xf32>
    %c0_19 = arith.constant 0 : index
    %c0_20 = arith.constant 0 : index
    %c0_21 = arith.constant 0 : index
    %c0_22 = arith.constant 0 : index
    %38 = vector.load %arg8[%c0_19, %c0_20, %c0_21, %c0_22] : memref<1x4x8x8xf32, #tpu.memory_space<vmem>>, vector<1x4x8x8xf32>
    %39 = vector.shape_cast %38 : vector<1x4x8x8xf32> to vector<4x8x8xf32>
    %40 = vector.shape_cast %37 : vector<4x8x8xf32> to vector<1x4x8x8xf32>
    tpu.vector_store %arg8[%c0_19, %c0_20, %c0_21, %c0_22], %40 {strides = array<i32>} : memref<1x4x8x8xf32, #tpu.memory_space<vmem>>, vector<1x4x8x8xf32>,
    %41 = vector.extract_strided_slice %28 {offsets = [0, 64], sizes = [8, 32], strides = [1, 1]} : vector<8x96xf32> to vector<8x32xf32>
    %42 = vector.shape_cast %41 : vector<8x32xf32> to vector<8x4x8xf32>
    %43 = tpu.transpose %42, [1, 0, 2] : vector<8x4x8xf32> -> vector<4x8x8xf32>
    %c0_23 = arith.constant 0 : index
    %c0_24 = arith.constant 0 : index
    %c0_25 = arith.constant 0 : index
    %c0_26 = arith.constant 0 : index
    %44 = vector.load %arg9[%c0_23, %c0_24, %c0_25, %c0_26] : memref<1x4x8x8xf32, #tpu.memory_space<vmem>>, vector<1x4x8x8xf32>
    %45 = vector.shape_cast %44 : vector<1x4x8x8xf32> to vector<4x8x8xf32>
    %46 = vector.shape_cast %43 : vector<4x8x8xf32> to vector<1x4x8x8xf32>
    tpu.vector_store %arg9[%c0_23, %c0_24, %c0_25, %c0_26], %46 {strides = array<i32>} : memref<1x4x8x8xf32, #tpu.memory_space<vmem>>, vector<1x4x8x8xf32>,
    return
  }
  func.func @transform_0(%arg0: i32, %arg1: i32) -> (i32, i32, i32) {
    %c0_i32 = arith.constant 0 : i32
    %c0_i32_0 = arith.constant 0 : i32
    return %arg0, %arg1, %c0_i32 : i32, i32, i32
  }
  func.func @transform_1(%arg0: i32, %arg1: i32) -> (i32, i32) {
    %c0_i32 = arith.constant 0 : i32
    %c0_i32_0 = arith.constant 0 : i32
    %c0_i32_1 = arith.constant 0 : i32
    return %c0_i32, %c0_i32_0 : i32, i32
  }
  func.func @transform_2(%arg0: i32, %arg1: i32) -> (i32, i32) {
    %c0_i32 = arith.constant 0 : i32
    %c0_i32_0 = arith.constant 0 : i32
    %c0_i32_1 = arith.constant 0 : i32
    return %c0_i32, %c0_i32_0 : i32, i32
  }
  func.func @transform_3(%arg0: i32, %arg1: i32) -> (i32, i32) {
    %c0_i32 = arith.constant 0 : i32
    %c0_i32_0 = arith.constant 0 : i32
    %c0_i32_1 = arith.constant 0 : i32
    return %c0_i32, %c0_i32_0 : i32, i32
  }
  func.func @transform_4(%arg0: i32, %arg1: i32) -> (i32, i32) {
    %c0_i32 = arith.constant 0 : i32
    %c0_i32_0 = arith.constant 0 : i32
    %c0_i32_1 = arith.constant 0 : i32
    return %c0_i32, %c0_i32_0 : i32, i32
  }
  func.func @transform_5(%arg0: i32, %arg1: i32) -> (i32, i32, i32, i32) {
    %c0_i32 = arith.constant 0 : i32
    %c0_i32_0 = arith.constant 0 : i32
    %c0_i32_1 = arith.constant 0 : i32
    return %arg0, %c0_i32, %arg1, %c0_i32_0 : i32, i32, i32, i32
  }
  func.func @transform_6(%arg0: i32, %arg1: i32) -> (i32, i32, i32, i32) {
    %c0_i32 = arith.constant 0 : i32
    %c0_i32_0 = arith.constant 0 : i32
    %c0_i32_1 = arith.constant 0 : i32
    return %arg0, %c0_i32, %arg1, %c0_i32_0 : i32, i32, i32, i32
  }
  func.func @transform_7(%arg0: i32, %arg1: i32) -> (i32, i32, i32, i32) {
    %c0_i32 = arith.constant 0 : i32
    %c0_i32_0 = arith.constant 0 : i32
    %c0_i32_1 = arith.constant 0 : i32
    return %arg0, %c0_i32, %arg1, %c0_i32_0 : i32, i32, i32, i32
  }
}

</mosaic_0001>

<llo_original>
// kernel: tpu_custom_call.1
$region0: #{tpu_custom_call.1}
  #allocation0 [shape = 'u32[]', space=smem, size = 0x4, offset = 0x4, fixed_abs, tag = 'smem constant byte address 0x4 - core index']
  #allocation1 [shape = 'u32[72,128]{1,0:T(1,128)}', space=vmem, size = 0x9000, scoped, tag = 'internal scratch']
  %s0 = inlined_call_operand.hbm [shape: f32[2,8,32], index: 0, kind: input, shape index: {}]
  %s1 = inlined_call_operand.hbm [shape: f32[1,32], index: 1, kind: input, shape index: {}]
  %s2 = inlined_call_operand.vmem [shape: f32[1,32], index: 2, kind: input, shape index: {}]
  %s3 = inlined_call_operand.hbm [shape: f32[32,96], index: 3, kind: input, shape index: {}]
  %s4 = inlined_call_operand.vmem [shape: f32[1,96], index: 4, kind: input, shape index: {}]
  %s5 = inlined_call_operand.hbm [shape: f32[2,4,8,8], index: 5, kind: output, shape index: {0}]
  %s6 = inlined_call_operand.hbm [shape: f32[2,4,8,8], index: 6, kind: output, shape index: {1}]
  %s7 = inlined_call_operand.hbm [shape: f32[2,4,8,8], index: 7, kind: output, shape index: {2}]
  %8 = xla_tuple %s5, %s6, %s7
  %s9 = sld [smem:[#allocation0]]
  $region81: #{tpu_custom_call.1} parent=0
    _
  %s11 = ssub.s32 1, %s9
  %s12 = scalar_select 0, %s11, %s9
  $region1: #{tpu_custom_call.1} parent=0
    #allocation2 [shape = 'u8[8192]{0}', space=vmem, size = 0x2000, scoped, tag = 'input window, operand 0']
    #allocation3 [shape = 's32[2]{0}', space=sflag, size = 0x8, scoped, tag = 'scoped memory for tpu_custom_call.1']
    #allocation4 [shape = 's32[2]{0}', space=sflag, size = 0x8, scoped, tag = 'scoped memory for tpu_custom_call.1']
    #allocation5 [shape = 'u8[512]{0}', space=vmem, size = 0x400, scoped, tag = 'input window, operand 1, single buffered']
    #allocation6 [shape = 's32[1]{0}', space=sflag, size = 0x4, scoped, tag = 'scoped memory for tpu_custom_call.1']
    #allocation7 [shape = 'u8[16384]{0}', space=vmem, size = 0x4000, scoped, tag = 'input window, operand 3, single buffered']
    #allocation8 [shape = 'u8[32768]{0}', space=vmem, size = 0x8000, scoped, tag = 'output window, operand 0']
    #allocation9 [shape = 'u8[32768]{0}', space=vmem, size = 0x8000, scoped, tag = 'output window, operand 1']
    #allocation10 [shape = 's32[2]{0}', space=sflag, size = 0x8, scoped, tag = 'scoped memory for tpu_custom_call.1']
    #allocation11 [shape = 'u8[32768]{0}', space=vmem, size = 0x8000, scoped, tag = 'output window, operand 2']
    %13 = vsyncpa [#allocation3], 0
    %s14 = scalar_lea.sflag [#allocation3], 1
    %15 = vsyncpa %s14, 0
    %16 = vsyncpa [#allocation6], 0
    %17 = vsyncpa [#allocation4], 0
    %s18 = scalar_lea.sflag [#allocation4], 1
    %19 = vsyncpa %s18, 0
    %20 = vsyncpa [#allocation10], 0
    %s21 = scalar_lea.sflag [#allocation10], 1
    %22 = vsyncpa %s21, 0
    loop: start=0, step=1, limit=4
    $region2: #{tpu_custom_call.1} parent=1 // loop_pre_header
      _
    $region3: #{tpu_custom_call.1} parent=1 // loop_header
      %s24 = sphi 0, %s28
      %p25 = scmp.ge.s32.totalorder %s24, 4
      %s31 = sphi 0, %s43
      %s32 = sphi 0, %s39
      %s33 = sphi 0, %s31
      %s34 = sphi 0, %s32
      %s35 = sphi 0, %s33
      %s36 = sphi 0, %s34
      %s48 = sphi 0, %s50
      %s51 = sphi 0, %s48
      %s52 = sphi 0, %s51
      %s68 = sphi 0, %s52
      %s72 = sphi 0, %s72
      %s74 = sphi 0, %s72
      %s75 = sphi 0, %s74
      %s89 = sphi 0, %s75
      %s93 = sphi 0, %s93
      %s95 = sphi 0, %s93
      %s96 = sphi 0, %s95
      %s110 = sphi 0, %s96
      %s114 = sphi 0, %s114
      %s116 = sphi 0, %s114
      %s117 = sphi 0, %s116
      %s131 = sphi 0, %s117
      %s135 = sphi 0, %s135
      %s137 = sphi 0, %s135
      %s138 = sphi 0, %s137
      %s152 = sphi 0, %s138
      %s160 = sphi 0, %s162
      %s163 = sphi 0, %s160
      %s164 = sphi 0, %s163
      %s180 = sphi 0, %s164
      %s188 = sphi 0, %s190
      %s191 = sphi 0, %s188
      %s192 = sphi 0, %s191
      %s208 = sphi 0, %s192
      %s216 = sphi 0, %s218
      %s219 = sphi 0, %s216
      %s220 = sphi 0, %s219
      %s236 = sphi 0, %s220
    $region4: #{tpu_custom_call.1} parent=1 // loop_header_branch
      %27 = sbr.rel (%p25) target = $region8
    $region5: #{tpu_custom_call.1} parent=1 // loop_body
      %s29 = ssub.s32 %s24, 1
      %s30 = ssub.s32 %s24, 2
      %s37 = sadd.s32 1, %s32
      %p38 = scmp.ge.s32.totalorder %s37, 1
      %s39 = scalar_select %p38, 0, %s37
      %s40 = sadd.s32 1, %s31
      %s41 = scalar_select %p38, %s40, %s31
      %p42 = scmp.ge.s32.totalorder %s41, 2
      %s43 = scalar_select %p42, 0, %s41
      %s44 = ssub.s32 %s31, %s43
      %s45 = ssub.s32 %s32, %s39
      %s46 = sor.u32 %s44, %s45
      %p47 = scmp.eq.s32.totalorder %s46, 0
      %s49 = sadd.s32 %s48, 1
      %s50 = scalar_select %p47, %s48, %s49
      %p53 = pneg %p47
      %p54 = scmp.eq.s32.totalorder %s24, 1
      %p55 = por %p53, %p54
      %p56 = scmp.ne.s32.totalorder %s48, %s51
      %p57 = scmp.eq.s32.totalorder %s24, 0
      %p58 = por %p56, %p57
      %p59 = scmp.ne.s32.totalorder %s48, %s51
      %p60 = scmp.eq.s32.totalorder %s29, 1
      %p61 = por %p59, %p60
      %p62 = scmp.ne.s32.totalorder %s51, %s52
      %p63 = scmp.eq.s32.totalorder %s29, 0
      %p64 = por %p62, %p63
      %p65 = scmp.ne.s32.totalorder %s51, %s52
      %p66 = scmp.eq.s32.totalorder %s30, 1
      %p67 = por %p65, %p66
      %p69 = scmp.ne.s32.totalorder %s52, %s68
      %p70 = scmp.eq.s32.totalorder %s30, 0
      %p71 = por %p69, %p70
      %s73 = sadd.s32 %s72, 1
      %p76 = scmp.eq.s32.totalorder %s24, 1
      %p77 = scmp.ne.s32.totalorder %s72, %s74
      %p78 = scmp.eq.s32.totalorder %s24, 0
      %p79 = por %p77, %p78
      %p80 = scmp.ne.s32.totalorder %s72, %s74
      %p81 = scmp.eq.s32.totalorder %s29, 1
      %p82 = por %p80, %p81
      %p83 = scmp.ne.s32.totalorder %s74, %s75
      %p84 = scmp.eq.s32.totalorder %s29, 0
      %p85 = por %p83, %p84
      %p86 = scmp.ne.s32.totalorder %s74, %s75
      %p87 = scmp.eq.s32.totalorder %s30, 1
      %p88 = por %p86, %p87
      %p90 = scmp.ne.s32.totalorder %s75, %s89
      %p91 = scmp.eq.s32.totalorder %s30, 0
      %p92 = por %p90, %p91
      %s94 = sadd.s32 %s93, 1
      %p97 = scmp.eq.s32.totalorder %s24, 1
      %p98 = scmp.ne.s32.totalorder %s93, %s95
      %p99 = scmp.eq.s32.totalorder %s24, 0
      %p100 = por %p98, %p99
      %p101 = scmp.ne.s32.totalorder %s93, %s95
      %p102 = scmp.eq.s32.totalorder %s29, 1
      %p103 = por %p101, %p102
      %p104 = scmp.ne.s32.totalorder %s95, %s96
      %p105 = scmp.eq.s32.totalorder %s29, 0
      %p106 = por %p104, %p105
      %p107 = scmp.ne.s32.totalorder %s95, %s96
      %p108 = scmp.eq.s32.totalorder %s30, 1
      %p109 = por %p107, %p108
      %p111 = scmp.ne.s32.totalorder %s96, %s110
      %p112 = scmp.eq.s32.totalorder %s30, 0
      %p113 = por %p111, %p112
      %s115 = sadd.s32 %s114, 1
      %p118 = scmp.eq.s32.totalorder %s24, 1
      %p119 = scmp.ne.s32.totalorder %s114, %s116
      %p120 = scmp.eq.s32.totalorder %s24, 0
      %p121 = por %p119, %p120
      %p122 = scmp.ne.s32.totalorder %s114, %s116
      %p123 = scmp.eq.s32.totalorder %s29, 1
      %p124 = por %p122, %p123
      %p125 = scmp.ne.s32.totalorder %s116, %s117
      %p126 = scmp.eq.s32.totalorder %s29, 0
      %p127 = por %p125, %p126
      %p128 = scmp.ne.s32.totalorder %s116, %s117
      %p129 = scmp.eq.s32.totalorder %s30, 1
      %p130 = por %p128, %p129
      %p132 = scmp.ne.s32.totalorder %s117, %s131
      %p133 = scmp.eq.s32.totalorder %s30, 0
      %p134 = por %p132, %p133
      %s136 = sadd.s32 %s135, 1
      %p139 = scmp.eq.s32.totalorder %s24, 1
      %p140 = scmp.ne.s32.totalorder %s135, %s137
      %p141 = scmp.eq.s32.totalorder %s24, 0
      %p142 = por %p140, %p141
      %p143 = scmp.ne.s32.totalorder %s135, %s137
      %p144 = scmp.eq.s32.totalorder %s29, 1
      %p145 = por %p143, %p144
      %p146 = scmp.ne.s32.totalorder %s137, %s138
      %p147 = scmp.eq.s32.totalorder %s29, 0
      %p148 = por %p146, %p147
      %p149 = scmp.ne.s32.totalorder %s137, %s138
      %p150 = scmp.eq.s32.totalorder %s30, 1
      %p151 = por %p149, %p150
      %p153 = scmp.ne.s32.totalorder %s138, %s152
      %p154 = scmp.eq.s32.totalorder %s30, 0
      %p155 = por %p153, %p154
      %s156 = ssub.s32 %s31, %s43
      %s157 = ssub.s32 %s32, %s39
      %s158 = sor.u32 %s156, %s157
      %p159 = scmp.eq.s32.totalorder %s158, 0
      %s161 = sadd.s32 %s160, 1
      %s162 = scalar_select %p159, %s160, %s161
      %p165 = pneg %p159
      %p166 = scmp.eq.s32.totalorder %s24, 1
      %p167 = por %p165, %p166
      %p168 = scmp.ne.s32.totalorder %s160, %s163
      %p169 = scmp.eq.s32.totalorder %s24, 0
      %p170 = por %p168, %p169
      %p171 = scmp.ne.s32.totalorder %s160, %s163
      %p172 = scmp.eq.s32.totalorder %s29, 1
      %p173 = por %p171, %p172
      %p174 = scmp.ne.s32.totalorder %s163, %s164
      %p175 = scmp.eq.s32.totalorder %s29, 0
      %p176 = por %p174, %p175
      %p177 = scmp.ne.s32.totalorder %s163, %s164
      %p178 = scmp.eq.s32.totalorder %s30, 1
      %p179 = por %p177, %p178
      %p181 = scmp.ne.s32.totalorder %s164, %s180
      %p182 = scmp.eq.s32.totalorder %s30, 0
      %p183 = por %p181, %p182
      %s184 = ssub.s32 %s31, %s43
      %s185 = ssub.s32 %s32, %s39
      %s186 = sor.u32 %s184, %s185
      %p187 = scmp.eq.s32.totalorder %s186, 0
      %s189 = sadd.s32 %s188, 1
      %s190 = scalar_select %p187, %s188, %s189
      %p193 = pneg %p187
      %p194 = scmp.eq.s32.totalorder %s24, 1
      %p195 = por %p193, %p194
      %p196 = scmp.ne.s32.totalorder %s188, %s191
      %p197 = scmp.eq.s32.totalorder %s24, 0
      %p198 = por %p196, %p197
      %p199 = scmp.ne.s32.totalorder %s188, %s191
      %p200 = scmp.eq.s32.totalorder %s29, 1
      %p201 = por %p199, %p200
      %p202 = scmp.ne.s32.totalorder %s191, %s192
      %p203 = scmp.eq.s32.totalorder %s29, 0
      %p204 = por %p202, %p203
      %p205 = scmp.ne.s32.totalorder %s191, %s192
      %p206 = scmp.eq.s32.totalorder %s30, 1
      %p207 = por %p205, %p206
      %p209 = scmp.ne.s32.totalorder %s192, %s208
      %p210 = scmp.eq.s32.totalorder %s30, 0
      %p211 = por %p209, %p210
      %s212 = ssub.s32 %s31, %s43
      %s213 = ssub.s32 %s32, %s39
      %s214 = sor.u32 %s212, %s213
      %p215 = scmp.eq.s32.totalorder %s214, 0
      %s217 = sadd.s32 %s216, 1
      %s218 = scalar_select %p215, %s216, %s217
      %p221 = pneg %p215
      %p222 = scmp.eq.s32.totalorder %s24, 1
      %p223 = por %p221, %p222
      %p224 = scmp.ne.s32.totalorder %s216, %s219
      %p225 = scmp.eq.s32.totalorder %s24, 0
      %p226 = por %p224, %p225
      %p227 = scmp.ne.s32.totalorder %s216, %s219
      %p228 = scmp.eq.s32.totalorder %s29, 1
      %p229 = por %p227, %p228
      %p230 = scmp.ne.s32.totalorder %s219, %s220
      %p231 = scmp.eq.s32.totalorder %s29, 0
      %p232 = por %p230, %p231
      %p233 = scmp.ne.s32.totalorder %s219, %s220
      %p234 = scmp.eq.s32.totalorder %s30, 1
      %p235 = por %p233, %p234
      %p237 = scmp.ne.s32.totalorder %s220, %s236
      %p238 = scmp.eq.s32.totalorder %s30, 0
      %p239 = por %p237, %p238
      %p240 = scmp.le.s32.totalorder 1, %s24
      %p241 = scmp.lt.s32.totalorder %s24, 3
      %p242 = pnand %p240, %p241
      %p243 = pneg %p242
      // Predicated region
      $region9: #{tpu_custom_call.1} parent=5 // pred_check
        _
      $region10: #{tpu_custom_call.1} parent=5 // pred_check_branch
        %245 = sbr.rel (%p242) target = $region12
      $region11: #{tpu_custom_call.1} parent=5 // pred_region
        %s246 = ssub.s32 %s24, 1
        // Predicated region
        $region13: #{tpu_custom_call.1} parent=11 // pred_check
          %p247 = pneg %p85
        $region14: #{tpu_custom_call.1} parent=11 // pred_check_branch
          %249 = sbr.rel (%p247) target = $region16
        $region15: #{tpu_custom_call.1} parent=11 // pred_region
          %251 = vsyncadd [#allocation6], 0
          %s253 = sshll.u32 %s1, 4
          %s254 = int_to_ptr.hbm [resolvable:$true] %s253
          %s255 = sshll.u32 [#allocation5], 4
          %s256 = int_to_ptr.vmem [resolvable:$true] %s255
          %258 = dma.hbm_to_vmem [thread:$0]  %s254, 16, %s256, [#allocation6]
        $region16: #{tpu_custom_call.1} parent=11 // pred_fallthru
          _
        // Predicated region
        $region17: #{tpu_custom_call.1} parent=11 // pred_check
          %p259 = pneg %p106
        $region18: #{tpu_custom_call.1} parent=11 // pred_check_branch
          %261 = sbr.rel (%p259) target = $region20
        $region19: #{tpu_custom_call.1} parent=11 // pred_region
          _
        $region20: #{tpu_custom_call.1} parent=11 // pred_fallthru
          _
        // Predicated region
        $region21: #{tpu_custom_call.1} parent=11 // pred_check
          %p262 = pneg %p127
        $region22: #{tpu_custom_call.1} parent=11 // pred_check_branch
          %264 = sbr.rel (%p262) target = $region24
        $region23: #{tpu_custom_call.1} parent=11 // pred_region
          %266 = vsyncadd [#allocation6], 0
          %s267 = sshll.u32 %s3, 4
          %s268 = int_to_ptr.hbm [resolvable:$true] %s267
          %s269 = sshll.u32 [#allocation7], 4
          %s270 = int_to_ptr.vmem [resolvable:$true] %s269
          %275 = dma.hbm_to_vmem [thread:$0]  %s268, 512, %s270, [#allocation6], 128, 128, 8
        $region24: #{tpu_custom_call.1} parent=11 // pred_fallthru
          _
        // Predicated region
        $region25: #{tpu_custom_call.1} parent=11 // pred_check
          %p276 = pneg %p148
        $region26: #{tpu_custom_call.1} parent=11 // pred_check_branch
          %278 = sbr.rel (%p276) target = $region28
        $region27: #{tpu_custom_call.1} parent=11 // pred_region
          _
        $region28: #{tpu_custom_call.1} parent=11 // pred_fallthru
          _
      $region12: #{tpu_custom_call.1} parent=5 // pred_fallthru
        _
      %p279 = scmp.lt.s32.totalorder %s24, 2
      // Predicated region
      $region29: #{tpu_custom_call.1} parent=5 // pred_check
        %p280 = pneg %p279
      $region30: #{tpu_custom_call.1} parent=5 // pred_check_branch
        %282 = sbr.rel (%p280) target = $region32
      $region31: #{tpu_custom_call.1} parent=5 // pred_region
        // Predicated region
        $region33: #{tpu_custom_call.1} parent=31 // pred_check
          %p283 = pneg %p58
        $region34: #{tpu_custom_call.1} parent=31 // pred_check_branch
          %285 = sbr.rel (%p283) target = $region36
        $region35: #{tpu_custom_call.1} parent=31 // pred_region
          %s286 = sand.u32 %s48, 1
          %s287 = scalar_lea.sflag [#allocation3], %s286
          %s288 = sand.u32 %s48, 1
          %s289 = smul.addr %s288, 8
          %s290 = scalar_lea.vmem [#allocation2], %s289
          %292 = vsyncadd %s287, 0
          %s293 = sadd.s32 %s32, %s31
          %s294 = smul.addr %s293, 8
          %s295 = scalar_lea.hbm %s0, %s294
          %s297 = sshll.u32 %s295, 4
          %s298 = int_to_ptr.hbm [resolvable:$true] %s297
          %s299 = sshll.u32 %s290, 4
          %s300 = int_to_ptr.vmem [resolvable:$true] %s299
          %302 = dma.hbm_to_vmem [thread:$0]  %s298, 128, %s300, %s287
        $region36: #{tpu_custom_call.1} parent=31 // pred_fallthru
          _
      $region32: #{tpu_custom_call.1} parent=5 // pred_fallthru
        _
      %p303 = scmp.le.s32.totalorder 1, %s24
      %p304 = scmp.lt.s32.totalorder %s24, 3
      %p305 = pnand %p303, %p304
      %p306 = pneg %p305
      // Predicated region
      $region37: #{tpu_custom_call.1} parent=5 // pred_check
        _
      $region38: #{tpu_custom_call.1} parent=5 // pred_check_branch
        %308 = sbr.rel (%p305) target = $region40
      $region39: #{tpu_custom_call.1} parent=5 // pred_region
        %s309 = ssub.s32 %s24, 1
        %s310 = sand.u32 %s51, 1
        %s311 = scalar_lea.sflag [#allocation3], %s310
        %s312 = sand.u32 %s51, 1
        %s313 = smul.addr %s312, 8
        %s314 = scalar_lea.vmem [#allocation2], %s313
        // Predicated region
        $region41: #{tpu_custom_call.1} parent=39 // pred_check
          %p315 = pneg %p64
        $region42: #{tpu_custom_call.1} parent=39 // pred_check_branch
          %317 = sbr.rel (%p315) target = $region44
        $region43: #{tpu_custom_call.1} parent=39 // pred_region
          %319 = dma.done %s311, 128
        $region44: #{tpu_custom_call.1} parent=39 // pred_fallthru
          _
        // Predicated region
        $region45: #{tpu_custom_call.1} parent=39 // pred_check
          %p320 = pneg %p85
        $region46: #{tpu_custom_call.1} parent=39 // pred_check_branch
          %322 = sbr.rel (%p320) target = $region48
        $region47: #{tpu_custom_call.1} parent=39 // pred_region
          %324 = dma.done [#allocation6], 16
        $region48: #{tpu_custom_call.1} parent=39 // pred_fallthru
          _
        // Predicated region
        $region49: #{tpu_custom_call.1} parent=39 // pred_check
          %p325 = pneg %p127
        $region50: #{tpu_custom_call.1} parent=39 // pred_check_branch
          %327 = sbr.rel (%p325) target = $region52
        $region51: #{tpu_custom_call.1} parent=39 // pred_region
          %329 = dma.done [#allocation6], 512
        $region52: #{tpu_custom_call.1} parent=39 // pred_fallthru
          _
        %s330 = sand.u32 %s51, 1
        %s331 = scalar_lea.sflag [#allocation3], %s330
        %s332 = sand.u32 %s51, 1
        %s333 = smul.addr %s332, 8
        %s334 = scalar_lea.vmem [#allocation2], %s333
        %p335 = pneg %p64
        %p336 = pneg %p61
        %p337 = pneg %p85
        %p338 = pneg %p82
        %p339 = pneg %p106
        %p340 = pneg %p103
        %p341 = pneg %p127
        %p342 = pneg %p124
        %p343 = pneg %p148
        %p344 = pneg %p145
        %p345 = pneg %p176
        %p346 = pneg %p173
        %s347 = sand.u32 %s163, 1
        %s348 = scalar_lea.sflag [#allocation4], %s347
        %s349 = sand.u32 %s163, 1
        %s350 = smul.addr %s349, 32
        %s351 = scalar_lea.vmem [#allocation8], %s350
        %p352 = pneg %p204
        %p353 = pneg %p201
        %s354 = sand.u32 %s29, 1
        %s355 = scalar_lea.sflag [#allocation10], %s354
        %s356 = sand.u32 %s191, 1
        %s357 = smul.addr %s356, 32
        %s358 = scalar_lea.vmem [#allocation9], %s357
        %p359 = pneg %p232
        %p360 = pneg %p229
        %s361 = sand.u32 %s29, 1
        %s362 = scalar_lea.sflag [#allocation10], %s361
        %s363 = sand.u32 %s219, 1
        %s364 = smul.addr %s363, 32
        %s365 = scalar_lea.vmem [#allocation11], %s364
        %v366 = vld [vmem:[%s314] sm:$0xff]
        %vm367 = vcmask 261120
        %v368 = vsel %vm367, %v366, 0.0
        %369 = vadd.xlane.f32.xlu0 %v368
        %v370 = vpop.xlane.xlu0 %369
        %v371 = vrcp.pop 32.0
        %v372 = vmul.f32 32.0, %v371
        %v373 = vsub.f32 1.0, %v372
        %v374 = vmul.f32 %v371, %v373
        %v375 = vadd.f32 %v371, %v374
        %vm376 = vweird.f32 %v371
        %v377 = vsel %vm376, %v371, %v375
        %v378 = vmul.f32 %v370, %v377
        %v379 = vsub.f32 %v366, %v378
        %v380 = vmul.f32 %v379, %v379
        %v381 = vsel %vm367, %v380, 0.0
        %382 = vadd.xlane.f32.xlu0 %v381
        %v383 = vpop.xlane.xlu0 %382
        %v384 = vmul.f32 %v383, %v377
        %v385 = vadd.f32 %v384, 1e-05
        %v386 = vrsqrt.pop %v385
        %v387 = vmul.f32 %v386, %v385
        %v388 = vmul.f32 %v387, %v386
        %v389 = vmul.f32 0.5, %v388
        %v390 = vsub.f32 1.5, %v389
        %v391 = vmul.f32 %v386, %v390
        %vm392 = vweird.f32 %v385
        %vm393 = vweird.f32 %v386
        %vm394 = vmor %vm392, %vm393
        %v395 = vsel %vm394, %v386, %v391
        %v396 = vmul.f32 %v379, %v395
        %v397 = vld [vmem:[#allocation5] sm:$0x1]
        %v399 = vperm.slane %v397, 0
        %v401 = vmul.f32 %v396, %v399
        %v402 = vld [vmem:[%s2] sm:$0x1]
        %v404 = vperm.slane %v402, 0
        %v406 = vadd.f32 %v401, %v404
        %v407 = vld [vmem:[#allocation7] sm:$0xff]
        %v408 = vld [vmem:[#allocation7 + $0x8] sm:$0xff]
        %v409 = vld [vmem:[#allocation7 + $0x10] sm:$0xff]
        %v410 = vld [vmem:[#allocation7 + $0x18] sm:$0xff]
        %v411 = vld [vmem:[%s4] sm:$0x1]
        %v413 = vperm.slane %v411, 0
        %v416 = vsel %vm367, %v406, 0
        %418 = vmatpush.msra.mxu0 0.0
        %419 = vmatpush.msra.mxu0 0.0
        %420 = vmatpush.msra.mxu0 0.0
        %421 = vmatpush.msra.mxu0 0.0
        %422 = vmatpush.msra.mxu0 0.0
        %423 = vmatpush.msra.mxu0 0.0
        %424 = vmatpush.msra.mxu0 0.0
        %425 = vmatpush.msra.mxu0 0.0
        %426 = vmatpush.msra.mxu0 0.0
        %427 = vmatpush.msra.mxu0 0.0
        %428 = vmatpush.msra.mxu0 0.0
        %429 = vmatpush.msra.mxu0 0.0
        %430 = vmatpush.msra.mxu0 %v410
        %431 = vmatpush.msra.mxu0 %v409
        %432 = vmatpush.msra.mxu0 %v408
        %433 = vmatpush.msra.mxu0 %v407
        %434 = vmatmul.f32.gmra.mxu0 %v416
        %v435 = vpop.f32.mrf.mxu0
        %v436 = vadd.f32 %v413, %v435
        %437 = vdwg.mxu0
        %439 = vrot.lane.b32.xlu0 %v436, 120
        %v440 = vpop.permute.xlu0 %439
        %442 = vrot.lane.b32.xlu0 %v436, 112
        %v443 = vpop.permute.xlu0 %442
        %445 = vrot.lane.b32.xlu0 %v436, 104
        %v446 = vpop.permute.xlu0 %445
        %v448 = vrot.slane %v443, 4
        %vm449 = vcmask 1047556
        %v450 = vsel %vm449, %v448, %v436
        %v451 = vrot.slane %v436, 4
        %v452 = vsel %vm449, %v443, %v451
        %v454 = vunpack.c.l.s4 1983009808
        %v455 = vunpack.c.0.s8 %v454
        %v456 = vperm.slane %v450, %v455
        %v458 = vunpack.c.l.s4 1983009808
        %v459 = vunpack.c.0.s8 %v458
        %v460 = vperm.slane %v452, %v459
        %v461 = vrot.slane %v446, 4
        %v462 = vsel %vm449, %v461, %v440
        %v463 = vrot.slane %v440, 4
        %v464 = vsel %vm449, %v446, %v463
        %v466 = vunpack.c.l.s4 1983009808
        %v467 = vunpack.c.0.s8 %v466
        %v468 = vperm.slane %v462, %v467
        %v470 = vunpack.c.l.s4 1983009808
        %v471 = vunpack.c.0.s8 %v470
        %v472 = vperm.slane %v464, %v471
        %v473 = vrot.slane %v468, 4
        %v474 = vsel %vm449, %v473, %v456
        %v475 = vrot.slane %v456, 4
        %v476 = vsel %vm449, %v468, %v475
        %v478 = vunpack.c.l.s4 1934713408
        %v479 = vunpack.c.0.s8 %v478
        %v480 = vperm.slane %v474, %v479
        %v482 = vunpack.c.l.s4 1934713408
        %v483 = vunpack.c.0.s8 %v482
        %v484 = vperm.slane %v476, %v483
        %v485 = vrot.slane %v472, 4
        %v486 = vsel %vm449, %v485, %v460
        %v487 = vrot.slane %v460, 4
        %v488 = vsel %vm449, %v472, %v487
        %v490 = vunpack.c.l.s4 1934713408
        %v491 = vunpack.c.0.s8 %v490
        %v492 = vperm.slane %v486, %v491
        %v494 = vunpack.c.l.s4 1934713408
        %v495 = vunpack.c.0.s8 %v494
        %v496 = vperm.slane %v488, %v495
        %v497 = vrot.slane %v480, 4
        %v498 = vsel %vm449, 0.0, %v497
        %v499 = vrot.slane %v484, 4
        %v500 = vsel %vm449, 0.0, %v499
        %v501 = vrot.slane %v492, 4
        %v502 = vsel %vm449, 0.0, %v501
        %v503 = vrot.slane %v496, 4
        %v504 = vsel %vm449, 0.0, %v503
        %v505 = vsel %vm449, %v499, %v480
        %v507 = vunpack.c.l.s4 1983009808
        %v508 = vunpack.c.0.s8 %v507
        %v509 = vperm.slane %v505, %v508
        %v510 = vrot.slane %v500, 4
        %v511 = vsel %vm449, %v510, %v498
        %v513 = vunpack.c.l.s4 1983009808
        %v514 = vunpack.c.0.s8 %v513
        %v515 = vperm.slane %v511, %v514
        %v516 = vsel %vm449, %v503, %v492
        %v518 = vunpack.c.l.s4 1983009808
        %v519 = vunpack.c.0.s8 %v518
        %v520 = vperm.slane %v516, %v519
        %v521 = vrot.slane %v504, 4
        %v522 = vsel %vm449, %v521, %v502
        %v524 = vunpack.c.l.s4 1983009808
        %v525 = vunpack.c.0.s8 %v524
        %v526 = vperm.slane %v522, %v525
        %v527 = vrot.slane %v515, 4
        %v528 = vsel %vm449, %v527, %v509
        %v529 = vrot.slane %v509, 4
        %v530 = vsel %vm449, %v515, %v529
        %v532 = vunpack.c.l.s4 1934713408
        %v533 = vunpack.c.0.s8 %v532
        %v534 = vperm.slane %v528, %v533
        %v536 = vunpack.c.l.s4 1934713408
        %v537 = vunpack.c.0.s8 %v536
        %v538 = vperm.slane %v530, %v537
        %v539 = vrot.slane %v526, 4
        %v540 = vsel %vm449, %v539, %v520
        %v541 = vrot.slane %v520, 4
        %v542 = vsel %vm449, %v526, %v541
        %v544 = vunpack.c.l.s4 1934713408
        %v545 = vunpack.c.0.s8 %v544
        %v546 = vperm.slane %v540, %v545
        %v548 = vunpack.c.l.s4 1934713408
        %v549 = vunpack.c.0.s8 %v548
        %v550 = vperm.slane %v542, %v549
        %v551 = vrot.slane %v546, 4
        %v552 = vsel %vm449, %v551, %v534
        %v553 = vrot.slane %v534, 4
        %v554 = vsel %vm449, %v546, %v553
        %v555 = vrot.slane %v550, 4
        %v556 = vsel %vm449, %v555, %v538
        %v557 = vrot.slane %v538, 4
        %v558 = vsel %vm449, %v550, %v557
        %vm559 = vcmask 64512
        %560 = vst.msk [vmem:[%s351] sm:$0xff] %vm559, %v552
        %561 = vst.msk [vmem:[%s351 + $0x8] sm:$0xff] %vm559, %v554
        %562 = vst.msk [vmem:[%s351 + $0x10] sm:$0xff] %vm559, %v556
        %563 = vst.msk [vmem:[%s351 + $0x18] sm:$0xff] %vm559, %v558
        %564 = vrot.lane.b32.xlu0 %v436, 96
        %v565 = vpop.permute.xlu0 %564
        %566 = vrot.lane.b32.xlu0 %v440, 96
        %v567 = vpop.permute.xlu0 %566
        %568 = vrot.lane.b32.xlu0 %v443, 96
        %v569 = vpop.permute.xlu0 %568
        %570 = vrot.lane.b32.xlu0 %v446, 96
        %v571 = vpop.permute.xlu0 %570
        %v576 = vrot.slane %v569, 4
        %v577 = vsel %vm449, %v576, %v565
        %v578 = vrot.slane %v565, 4
        %v579 = vsel %vm449, %v569, %v578
        %v581 = vunpack.c.l.s4 1983009808
        %v582 = vunpack.c.0.s8 %v581
        %v583 = vperm.slane %v577, %v582
        %v585 = vunpack.c.l.s4 1983009808
        %v586 = vunpack.c.0.s8 %v585
        %v587 = vperm.slane %v579, %v586
        %v588 = vrot.slane %v571, 4
        %v589 = vsel %vm449, %v588, %v567
        %v590 = vrot.slane %v567, 4
        %v591 = vsel %vm449, %v571, %v590
        %v593 = vunpack.c.l.s4 1983009808
        %v594 = vunpack.c.0.s8 %v593
        %v595 = vperm.slane %v589, %v594
        %v597 = vunpack.c.l.s4 1983009808
        %v598 = vunpack.c.0.s8 %v597
        %v599 = vperm.slane %v591, %v598
        %v600 = vrot.slane %v595, 4
        %v601 = vsel %vm449, %v600, %v583
        %v602 = vrot.slane %v583, 4
        %v603 = vsel %vm449, %v595, %v602
        %v605 = vunpack.c.l.s4 1934713408
        %v606 = vunpack.c.0.s8 %v605
        %v607 = vperm.slane %v601, %v606
        %v609 = vunpack.c.l.s4 1934713408
        %v610 = vunpack.c.0.s8 %v609
        %v611 = vperm.slane %v603, %v610
        %v612 = vrot.slane %v599, 4
        %v613 = vsel %vm449, %v612, %v587
        %v614 = vrot.slane %v587, 4
        %v615 = vsel %vm449, %v599, %v614
        %v617 = vunpack.c.l.s4 1934713408
        %v618 = vunpack.c.0.s8 %v617
        %v619 = vperm.slane %v613, %v618
        %v621 = vunpack.c.l.s4 1934713408
        %v622 = vunpack.c.0.s8 %v621
        %v623 = vperm.slane %v615, %v622
        %v624 = vrot.slane %v607, 4
        %v625 = vsel %vm449, 0.0, %v624
        %v626 = vrot.slane %v611, 4
        %v627 = vsel %vm449, 0.0, %v626
        %v628 = vrot.slane %v619, 4
        %v629 = vsel %vm449, 0.0, %v628
        %v630 = vrot.slane %v623, 4
        %v631 = vsel %vm449, 0.0, %v630
        %v632 = vsel %vm449, %v626, %v607
        %v634 = vunpack.c.l.s4 1983009808
        %v635 = vunpack.c.0.s8 %v634
        %v636 = vperm.slane %v632, %v635
        %v637 = vrot.slane %v627, 4
        %v638 = vsel %vm449, %v637, %v625
        %v640 = vunpack.c.l.s4 1983009808
        %v641 = vunpack.c.0.s8 %v640
        %v642 = vperm.slane %v638, %v641
        %v643 = vsel %vm449, %v630, %v619
        %v645 = vunpack.c.l.s4 1983009808
        %v646 = vunpack.c.0.s8 %v645
        %v647 = vperm.slane %v643, %v646
        %v648 = vrot.slane %v631, 4
        %v649 = vsel %vm449, %v648, %v629
        %v651 = vunpack.c.l.s4 1983009808
        %v652 = vunpack.c.0.s8 %v651
        %v653 = vperm.slane %v649, %v652
        %v654 = vrot.slane %v642, 4
        %v655 = vsel %vm449, %v654, %v636
        %v656 = vrot.slane %v636, 4
        %v657 = vsel %vm449, %v642, %v656
        %v659 = vunpack.c.l.s4 1934713408
        %v660 = vunpack.c.0.s8 %v659
        %v661 = vperm.slane %v655, %v660
        %v663 = vunpack.c.l.s4 1934713408
        %v664 = vunpack.c.0.s8 %v663
        %v665 = vperm.slane %v657, %v664
        %v666 = vrot.slane %v653, 4
        %v667 = vsel %vm449, %v666, %v647
        %v668 = vrot.slane %v647, 4
        %v669 = vsel %vm449, %v653, %v668
        %v671 = vunpack.c.l.s4 1934713408
        %v672 = vunpack.c.0.s8 %v671
        %v673 = vperm.slane %v667, %v672
        %v675 = vunpack.c.l.s4 1934713408
        %v676 = vunpack.c.0.s8 %v675
        %v677 = vperm.slane %v669, %v676
        %v678 = vrot.slane %v673, 4
        %v679 = vsel %vm449, %v678, %v661
        %v680 = vrot.slane %v661, 4
        %v681 = vsel %vm449, %v673, %v680
        %v682 = vrot.slane %v677, 4
        %v683 = vsel %vm449, %v682, %v665
        %v684 = vrot.slane %v665, 4
        %v685 = vsel %vm449, %v677, %v684
        %686 = vst.msk [vmem:[%s358] sm:$0xff] %vm559, %v679
        %687 = vst.msk [vmem:[%s358 + $0x8] sm:$0xff] %vm559, %v681
        %688 = vst.msk [vmem:[%s358 + $0x10] sm:$0xff] %vm559, %v683
        %689 = vst.msk [vmem:[%s358 + $0x18] sm:$0xff] %vm559, %v685
        %690 = vrot.lane.b32.xlu0 %v436, 64
        %v691 = vpop.permute.xlu0 %690
        %692 = vrot.lane.b32.xlu0 %v440, 64
        %v693 = vpop.permute.xlu0 %692
        %694 = vrot.lane.b32.xlu0 %v443, 64
        %v695 = vpop.permute.xlu0 %694
        %696 = vrot.lane.b32.xlu0 %v446, 64
        %v697 = vpop.permute.xlu0 %696
        %v702 = vrot.slane %v695, 4
        %v703 = vsel %vm449, %v702, %v691
        %v704 = vrot.slane %v691, 4
        %v705 = vsel %vm449, %v695, %v704
        %v707 = vunpack.c.l.s4 1983009808
        %v708 = vunpack.c.0.s8 %v707
        %v709 = vperm.slane %v703, %v708
        %v711 = vunpack.c.l.s4 1983009808
        %v712 = vunpack.c.0.s8 %v711
        %v713 = vperm.slane %v705, %v712
        %v714 = vrot.slane %v697, 4
        %v715 = vsel %vm449, %v714, %v693
        %v716 = vrot.slane %v693, 4
        %v717 = vsel %vm449, %v697, %v716
        %v719 = vunpack.c.l.s4 1983009808
        %v720 = vunpack.c.0.s8 %v719
        %v721 = vperm.slane %v715, %v720
        %v723 = vunpack.c.l.s4 1983009808
        %v724 = vunpack.c.0.s8 %v723
        %v725 = vperm.slane %v717, %v724
        %v726 = vrot.slane %v721, 4
        %v727 = vsel %vm449, %v726, %v709
        %v728 = vrot.slane %v709, 4
        %v729 = vsel %vm449, %v721, %v728
        %v731 = vunpack.c.l.s4 1934713408
        %v732 = vunpack.c.0.s8 %v731
        %v733 = vperm.slane %v727, %v732
        %v735 = vunpack.c.l.s4 1934713408
        %v736 = vunpack.c.0.s8 %v735
        %v737 = vperm.slane %v729, %v736
        %v738 = vrot.slane %v725, 4
        %v739 = vsel %vm449, %v738, %v713
        %v740 = vrot.slane %v713, 4
        %v741 = vsel %vm449, %v725, %v740
        %v743 = vunpack.c.l.s4 1934713408
        %v744 = vunpack.c.0.s8 %v743
        %v745 = vperm.slane %v739, %v744
        %v747 = vunpack.c.l.s4 1934713408
        %v748 = vunpack.c.0.s8 %v747
        %v749 = vperm.slane %v741, %v748
        %v750 = vrot.slane %v733, 4
        %v751 = vsel %vm449, 0.0, %v750
        %v752 = vrot.slane %v737, 4
        %v753 = vsel %vm449, 0.0, %v752
        %v754 = vrot.slane %v745, 4
        %v755 = vsel %vm449, 0.0, %v754
        %v756 = vrot.slane %v749, 4
        %v757 = vsel %vm449, 0.0, %v756
        %v758 = vsel %vm449, %v752, %v733
        %v760 = vunpack.c.l.s4 1983009808
        %v761 = vunpack.c.0.s8 %v760
        %v762 = vperm.slane %v758, %v761
        %v763 = vrot.slane %v753, 4
        %v764 = vsel %vm449, %v763, %v751
        %v766 = vunpack.c.l.s4 1983009808
        %v767 = vunpack.c.0.s8 %v766
        %v768 = vperm.slane %v764, %v767
        %v769 = vsel %vm449, %v756, %v745
        %v771 = vunpack.c.l.s4 1983009808
        %v772 = vunpack.c.0.s8 %v771
        %v773 = vperm.slane %v769, %v772
        %v774 = vrot.slane %v757, 4
        %v775 = vsel %vm449, %v774, %v755
        %v777 = vunpack.c.l.s4 1983009808
        %v778 = vunpack.c.0.s8 %v777
        %v779 = vperm.slane %v775, %v778
        %v780 = vrot.slane %v768, 4
        %v781 = vsel %vm449, %v780, %v762
        %v782 = vrot.slane %v762, 4
        %v783 = vsel %vm449, %v768, %v782
        %v785 = vunpack.c.l.s4 1934713408
        %v786 = vunpack.c.0.s8 %v785
        %v787 = vperm.slane %v781, %v786
        %v789 = vunpack.c.l.s4 1934713408
        %v790 = vunpack.c.0.s8 %v789
        %v791 = vperm.slane %v783, %v790
        %v792 = vrot.slane %v779, 4
        %v793 = vsel %vm449, %v792, %v773
        %v794 = vrot.slane %v773, 4
        %v795 = vsel %vm449, %v779, %v794
        %v797 = vunpack.c.l.s4 1934713408
        %v798 = vunpack.c.0.s8 %v797
        %v799 = vperm.slane %v793, %v798
        %v801 = vunpack.c.l.s4 1934713408
        %v802 = vunpack.c.0.s8 %v801
        %v803 = vperm.slane %v795, %v802
        %v804 = vrot.slane %v799, 4
        %v805 = vsel %vm449, %v804, %v787
        %v806 = vrot.slane %v787, 4
        %v807 = vsel %vm449, %v799, %v806
        %v808 = vrot.slane %v803, 4
        %v809 = vsel %vm449, %v808, %v791
        %v810 = vrot.slane %v791, 4
        %v811 = vsel %vm449, %v803, %v810
        %812 = vst.msk [vmem:[%s365] sm:$0xff] %vm559, %v805
        %813 = vst.msk [vmem:[%s365 + $0x8] sm:$0xff] %vm559, %v807
        %814 = vst.msk [vmem:[%s365 + $0x10] sm:$0xff] %vm559, %v809
        %815 = vst.msk [vmem:[%s365 + $0x18] sm:$0xff] %vm559, %v811
        %s816 = sand.u32 %s163, 1
        %s817 = scalar_lea.sflag [#allocation4], %s816
        %s818 = sand.u32 %s163, 1
        %s819 = smul.addr %s818, 32
        %s820 = scalar_lea.vmem [#allocation8], %s819
        %s821 = sand.u32 %s29, 1
        %s822 = scalar_lea.sflag [#allocation10], %s821
        %s823 = sand.u32 %s191, 1
        %s824 = smul.addr %s823, 32
        %s825 = scalar_lea.vmem [#allocation9], %s824
        %s826 = sand.u32 %s29, 1
        %s827 = scalar_lea.sflag [#allocation10], %s826
        %s828 = sand.u32 %s219, 1
        %s829 = smul.addr %s828, 32
        %s830 = scalar_lea.vmem [#allocation11], %s829
        // Predicated region
        $region53: #{tpu_custom_call.1} parent=39 // pred_check
          %p831 = pneg %p173
        $region54: #{tpu_custom_call.1} parent=39 // pred_check_branch
          %833 = sbr.rel (%p831) target = $region56
        $region55: #{tpu_custom_call.1} parent=39 // pred_region
          %835 = vsyncadd %s817, 0
          %s836 = smul.addr %s33, 4
          %s837 = sadd.s32 %s34, %s836
          %s838 = smul.addr %s837, 8
          %s839 = scalar_lea.hbm %s5, %s838
          %s840 = sshll.u32 %s820, 4
          %s841 = int_to_ptr.vmem [resolvable:$true] %s840
          %s842 = sshll.u32 %s839, 4
          %s843 = int_to_ptr.hbm [resolvable:$true] %s842
          %848 = dma.vmem_to_hbm [thread:$0]  %s841, 512, %s843, %s817, 128, 128, 8
        $region56: #{tpu_custom_call.1} parent=39 // pred_fallthru
          _
        // Predicated region
        $region57: #{tpu_custom_call.1} parent=39 // pred_check
          %p849 = pneg %p201
        $region58: #{tpu_custom_call.1} parent=39 // pred_check_branch
          %851 = sbr.rel (%p849) target = $region60
        $region59: #{tpu_custom_call.1} parent=39 // pred_region
          %853 = vsyncadd %s822, 0
          %s854 = smul.addr %s33, 4
          %s855 = sadd.s32 %s34, %s854
          %s856 = smul.addr %s855, 8
          %s857 = scalar_lea.hbm %s6, %s856
          %s858 = sshll.u32 %s825, 4
          %s859 = int_to_ptr.vmem [resolvable:$true] %s858
          %s860 = sshll.u32 %s857, 4
          %s861 = int_to_ptr.hbm [resolvable:$true] %s860
          %866 = dma.vmem_to_hbm [thread:$0]  %s859, 512, %s861, %s822, 128, 128, 8
        $region60: #{tpu_custom_call.1} parent=39 // pred_fallthru
          _
        // Predicated region
        $region61: #{tpu_custom_call.1} parent=39 // pred_check
          %p867 = pneg %p229
        $region62: #{tpu_custom_call.1} parent=39 // pred_check_branch
          %869 = sbr.rel (%p867) target = $region64
        $region63: #{tpu_custom_call.1} parent=39 // pred_region
          %871 = vsyncadd %s827, 0
          %s872 = smul.addr %s33, 4
          %s873 = sadd.s32 %s34, %s872
          %s874 = smul.addr %s873, 8
          %s875 = scalar_lea.hbm %s7, %s874
          %s876 = sshll.u32 %s830, 4
          %s877 = int_to_ptr.vmem [resolvable:$true] %s876
          %s878 = sshll.u32 %s875, 4
          %s879 = int_to_ptr.hbm [resolvable:$true] %s878
          %884 = dma.vmem_to_hbm [thread:$0]  %s877, 512, %s879, %s827, 128, 128, 8
        $region64: #{tpu_custom_call.1} parent=39 // pred_fallthru
          _
      $region40: #{tpu_custom_call.1} parent=5 // pred_fallthru
        _
      %p885 = scmp.le.s32.totalorder 2, %s24
      // Predicated region
      $region65: #{tpu_custom_call.1} parent=5 // pred_check
        %p886 = pneg %p885
      $region66: #{tpu_custom_call.1} parent=5 // pred_check_branch
        %888 = sbr.rel (%p886) target = $region68
      $region67: #{tpu_custom_call.1} parent=5 // pred_region
        %s889 = ssub.s32 %s24, 2
        // Predicated region
        $region69: #{tpu_custom_call.1} parent=67 // pred_check
          %p890 = pneg %p179
        $region70: #{tpu_custom_call.1} parent=67 // pred_check_branch
          %892 = sbr.rel (%p890) target = $region72
        $region71: #{tpu_custom_call.1} parent=67 // pred_region
          %s893 = sand.u32 %s164, 1
          %s894 = scalar_lea.sflag [#allocation4], %s893
          %s895 = sand.u32 %s164, 1
          %s896 = smul.addr %s895, 32
          %s897 = scalar_lea.vmem [#allocation8], %s896
          %899 = dma.done %s894, 512
        $region72: #{tpu_custom_call.1} parent=67 // pred_fallthru
          _
        // Predicated region
        $region73: #{tpu_custom_call.1} parent=67 // pred_check
          %p900 = pneg %p207
        $region74: #{tpu_custom_call.1} parent=67 // pred_check_branch
          %902 = sbr.rel (%p900) target = $region76
        $region75: #{tpu_custom_call.1} parent=67 // pred_region
          %s903 = sand.u32 %s30, 1
          %s904 = scalar_lea.sflag [#allocation10], %s903
          %s905 = sand.u32 %s192, 1
          %s906 = smul.addr %s905, 32
          %s907 = scalar_lea.vmem [#allocation9], %s906
          %909 = dma.done %s904, 512
        $region76: #{tpu_custom_call.1} parent=67 // pred_fallthru
          _
        // Predicated region
        $region77: #{tpu_custom_call.1} parent=67 // pred_check
          %p910 = pneg %p235
        $region78: #{tpu_custom_call.1} parent=67 // pred_check_branch
          %912 = sbr.rel (%p910) target = $region80
        $region79: #{tpu_custom_call.1} parent=67 // pred_region
          %s913 = sand.u32 %s30, 1
          %s914 = scalar_lea.sflag [#allocation10], %s913
          %s915 = sand.u32 %s220, 1
          %s916 = smul.addr %s915, 32
          %s917 = scalar_lea.vmem [#allocation11], %s916
          %919 = dma.done %s914, 512
        $region80: #{tpu_custom_call.1} parent=67 // pred_fallthru
          _
      $region68: #{tpu_custom_call.1} parent=5 // pred_fallthru
        _
    $region6: #{tpu_custom_call.1} parent=1 // loop_footer
      %s28 = sadd.s32 1, %s24
    $region7: #{tpu_custom_call.1} parent=1 // loop_footer_branch
      %23 = sbr.rel target = $region3
    $region8: #{tpu_custom_call.1} parent=1 // loop_exit
      _
    %920 = vsyncpa [#allocation3], 1
    %s921 = scalar_lea.sflag [#allocation3], 1
    %922 = vsyncpa %s921, 1
    %923 = vsyncpa [#allocation6], 1
    %924 = vsyncpa [#allocation4], 1
    %s925 = scalar_lea.sflag [#allocation4], 1
    %926 = vsyncpa %s925, 1
    %927 = vsyncpa [#allocation10], 1
    %s928 = scalar_lea.sflag [#allocation10], 1
    %929 = vsyncpa %s928, 1

</llo_original>
